<compile_context>
chip_gen: v5e
topology: v5e:2x2
jax: 0.10.0
libtpu: 0.0.40
codegen_flags: <defaults>
</compile_context>

<pallas_src>
import functools

import jax
import jax.numpy as jnp
from jax.experimental import pallas as pl
from jax.experimental.pallas import tpu as pltpu


def _round_up(x, m):
    return (x + m - 1) // m * m


def _matmul_relu_kernel(x_ref, w_ref, o_ref, *, apply_relu):
    # x_ref: (TM, Kp) im2col tile, w_ref: (Kp, TN) weight tile, o_ref: (TM, TN).
    # Single MXU contraction, f32 accumulation in vregs, one lane-dense store.
    acc = jnp.dot(x_ref[...], w_ref[...], preferred_element_type=jnp.float32)
    if apply_relu:
        acc = jnp.maximum(acc, 0.0)
    o_ref[...] = acc.astype(o_ref.dtype)


def basic_conv_forward(x_nchw, weight_oihw, *, stride=1, padding=0, relu=True,
                       compute_dtype=None):
    """BasicConv forward (bias=False, bn=False): ReLU(conv2d(x)).

    x_nchw:      [N, Cin, H, W]   (PyTorch layout)
    weight_oihw: [Cout, Cin, KH, KW]
    returns:     [N, Cout, OH, OW]
    """
    # TODO(synk): dilation != 1, groups != 1 and the bias=True / bn=True variants
    # are not implemented (BasicConv defaults: dilation=1, groups=1, bias=False, bn=False).
    N, Cin, H, W = x_nchw.shape
    Cout, Cin_w, KH, KW = weight_oihw.shape
    assert Cin == Cin_w

    OH = (H + 2 * padding - KH) // stride + 1
    OW = (W + 2 * padding - KW) // stride + 1

    # ---- plain-JAX glue: NCHW -> NHWC, spatial pad, im2col to (M, K) ----
    x_nhwc = jnp.transpose(x_nchw, (0, 2, 3, 1))
    x_pad = jnp.pad(x_nhwc, ((0, 0), (padding, padding), (padding, padding), (0, 0)))
    taps = []
    for kh in range(KH):
        for kw in range(KW):
            taps.append(x_pad[:,
                              kh:kh + stride * (OH - 1) + 1:stride,
                              kw:kw + stride * (OW - 1) + 1:stride, :])
    # (N, OH, OW, KH*KW, Cin) -> (M, K); K index = (kh*KW + kw)*Cin + cin.
    patches = jnp.stack(taps, axis=3).reshape(N * OH * OW, KH * KW * Cin)
    # weight OIHW -> HWIO -> (K, Cout) with the same K ordering.
    w2d = jnp.transpose(weight_oihw, (2, 3, 1, 0)).reshape(KH * KW * Cin, Cout)

    M, K = patches.shape

    # Tile sizes: M tile a multiple of 8 (aim 256 for the v6e/v7x 256-wide MXU),
    # Cout padded to a multiple of 128 so output stores are lane-dense,
    # K padded to a multiple of 16 (covers f32/bf16 sublane tiling).
    TM = 256 if M >= 256 else _round_up(M, 8)
    Kp = _round_up(K, 16)
    Cout_p = _round_up(Cout, 128)
    TN = 256 if Cout_p % 256 == 0 else 128
    Mp = _round_up(M, TM)

    patches = jnp.pad(patches, ((0, Mp - M), (0, Kp - K)))
    w2d = jnp.pad(w2d, ((0, Kp - K), (0, Cout_p - Cout)))
    if compute_dtype is not None:
        # bf16 operands (v6e/v7x MXU-native); accumulation stays f32 in-kernel.
        patches = patches.astype(compute_dtype)
        w2d = w2d.astype(compute_dtype)

    kernel = functools.partial(_matmul_relu_kernel, apply_relu=relu)

    out2d = pl.pallas_call(
        kernel,
        out_shape=jax.ShapeDtypeStruct((Mp, Cout_p), x_nchw.dtype),
        grid_spec=pltpu.PrefetchScalarGridSpec(
            num_scalar_prefetch=0,
            grid=(Mp // TM, Cout_p // TN),
            in_specs=[
                pl.BlockSpec((TM, Kp), lambda i, j: (i, 0)),
                pl.BlockSpec((Kp, TN), lambda i, j: (0, j)),
            ],
            out_specs=pl.BlockSpec((TM, TN), lambda i, j: (i, j)),
        ),
        compiler_params=pltpu.CompilerParams(
            dimension_semantics=("parallel", "parallel"),
            vmem_limit_bytes=32 * 1024 * 1024,
        ),
    )(patches, w2d)

    # ---- plain-JAX glue: strip padding, back to NCHW ----
    out = out2d[:M, :Cout].reshape(N, OH, OW, Cout)
    return jnp.transpose(out, (0, 3, 1, 2))


if __name__ == "__main__":
    key = jax.random.PRNGKey(0)
    kx, kw = jax.random.split(key)

    # Small shapes consistent with BasicConv: in_planes=4, out_planes=8, kernel=3, pad=1.
    N, Cin, H, W = 2, 4, 16, 16
    Cout, KH, KW = 8, 3, 3

    x = jax.random.normal(kx, (N, Cin, H, W), dtype=jnp.float32)
    weight = jax.random.normal(kw, (Cout, Cin, KH, KW), dtype=jnp.float32) * 0.1

    out = basic_conv_forward(x, weight, stride=1, padding=1, relu=True)
    out = jax.block_until_ready(out)

    # Reference check with XLA conv (NCHW, OIHW) + ReLU.
    ref = jax.lax.conv_general_dilated(
        x, weight, window_strides=(1, 1), padding=((1, 1), (1, 1)),
        dimension_numbers=("NCHW", "OIHW", "NCHW"))
    ref = jnp.maximum(ref, 0.0)
    assert out.shape == (N, Cout, H, W)
    assert jnp.allclose(out, ref, atol=1e-4, rtol=1e-4)

    # bf16-operand MXU path (the v6e/v7x performance path); looser tolerance.
    out_bf16 = basic_conv_forward(x, weight, stride=1, padding=1, relu=True,
                                  compute_dtype=jnp.bfloat16)
    out_bf16 = jax.block_until_ready(out_bf16)
    assert jnp.allclose(out_bf16, ref, atol=5e-2, rtol=5e-2)

    print("KERNEL_OK")
</pallas_src>

<mosaic_0001>
module attributes {stable_mosaic.version = 11 : i64} {
  func.func @_matmul_relu_kernel(%arg0: i32, %arg1: i32, %arg2: memref<256x48xf32, #tpu.memory_space<vmem>>, %arg3: memref<48x128xf32, #tpu.memory_space<vmem>>, %arg4: memref<256x128xf32, #tpu.memory_space<vmem>>) attributes {dimension_semantics = [#tpu.dimension_semantics<parallel>, #tpu.dimension_semantics<parallel>], iteration_bounds = array<i64: 2, 1>, scalar_prefetch = 0 : i64, scratch_operands = 0 : i64, tpu.core_type = #tpu.core_type<tc>, window_params = [{transform_indices = @transform_0, window_bounds = array<i64: 256, 48>}, {transform_indices = @transform_1, window_bounds = array<i64: 48, 128>}, {transform_indices = @transform_2, window_bounds = array<i64: 256, 128>}]} {
    %c0 = arith.constant 0 : index
    %c0_0 = arith.constant 0 : index
    %0 = vector.load %arg2[%c0, %c0_0] : memref<256x48xf32, #tpu.memory_space<vmem>>, vector<256x48xf32>
    %c0_1 = arith.constant 0 : index
    %c0_2 = arith.constant 0 : index
    %1 = vector.load %arg3[%c0_1, %c0_2] : memref<48x128xf32, #tpu.memory_space<vmem>>, vector<48x128xf32>
    %cst = arith.constant dense<0.000000e+00> : vector<256x128xf32>
    %2 = tpu.matmul %0, %1, %cst {dimension_numbers = #tpu.dot_dimension_numbers<[1], [0], [0], [1], [0, 0, 1, 1], [], []>} : vector<256x48xf32>, vector<48x128xf32>, vector<256x128xf32> -> vector<256x128xf32>
    %cst_3 = arith.constant 0.000000e+00 : f32
    %3 = vector.broadcast %cst_3 : f32 to vector<256x128xf32>
    %4 = arith.maximumf %2, %3 : vector<256x128xf32>
    %c0_4 = arith.constant 0 : index
    %c0_5 = arith.constant 0 : index
    %5 = vector.load %arg4[%c0_4, %c0_5] : memref<256x128xf32, #tpu.memory_space<vmem>>, vector<256x128xf32>
    tpu.vector_store %arg4[%c0_4, %c0_5], %4 {strides = array<i32>} : memref<256x128xf32, #tpu.memory_space<vmem>>, vector<256x128xf32>,
    return
  }
  func.func @transform_0(%arg0: i32, %arg1: i32) -> (i32, i32) {
    %c0_i32 = arith.constant 0 : i32
    %c0_i32_0 = arith.constant 0 : i32
    return %arg0, %c0_i32 : i32, i32
  }
  func.func @transform_1(%arg0: i32, %arg1: i32) -> (i32, i32) {
    %c0_i32 = arith.constant 0 : i32
    %c0_i32_0 = arith.constant 0 : i32
    return %c0_i32, %arg1 : i32, i32
  }
  func.func @transform_2(%arg0: i32, %arg1: i32) -> (i32, i32) {
    %c0_i32 = arith.constant 0 : i32
    return %arg0, %arg1 : i32, i32
  }
}

</mosaic_0001>

<llo_original>
// kernel: tpu_custom_call.1
$region0: #{tpu_custom_call.1}
  #allocation0 [shape = 'u32[]', space=smem, size = 0x4, offset = 0x4, fixed_abs, tag = 'smem constant byte address 0x4 - core index']
  #allocation1 [shape = 'u32[72,128]{1,0:T(1,128)}', space=vmem, size = 0x9000, scoped, tag = 'internal scratch']
  %s0 = inlined_call_operand.vmem [shape: f32[512,48], index: 0, kind: input, shape index: {}]
  %s1 = inlined_call_operand.vmem [shape: f32[48,128], index: 1, kind: input, shape index: {}]
  %s2 = inlined_call_operand.hbm [shape: f32[512,128], index: 2, kind: output, shape index: {}]
  %s3 = sld [smem:[#allocation0]]
  $region41: #{tpu_custom_call.1} parent=0
    _
  %s5 = ssub.s32 1, %s3
  %s6 = scalar_select 0, %s5, %s3
  $region1: #{tpu_custom_call.1} parent=0
    #allocation2 [shape = 'u8[262144]{0}', space=vmem, size = 0x40000, scoped, tag = 'output window, operand 0']
    #allocation3 [shape = 's32[2]{0}', space=sflag, size = 0x8, scoped, tag = 'scoped memory for tpu_custom_call.1']
    %7 = vsyncpa [#allocation3], 0
    %s8 = scalar_lea.sflag [#allocation3], 1
    %9 = vsyncpa %s8, 0
    loop: start=0, step=1, limit=4
    $region2: #{tpu_custom_call.1} parent=1 // loop_pre_header
      _
    $region3: #{tpu_custom_call.1} parent=1 // loop_header
      %s11 = sphi 0, %s15
      %p12 = scmp.ge.s32.totalorder %s11, 4
      %s18 = sphi 0, %s30
      %s19 = sphi 0, %s26
      %s20 = sphi 0, %s18
      %s21 = sphi 0, %s19
      %s22 = sphi 0, %s20
      %s23 = sphi 0, %s21
      %s33 = sphi 0, %s35
      %s36 = sphi 0, %s33
      %s37 = sphi 0, %s36
      %s53 = sphi 0, %s37
      %s59 = sphi 0, %s61
      %s62 = sphi 0, %s59
      %s63 = sphi 0, %s62
      %s79 = sphi 0, %s63
      %s87 = sphi 0, %s89
      %s90 = sphi 0, %s87
      %s91 = sphi 0, %s90
      %s107 = sphi 0, %s91
    $region4: #{tpu_custom_call.1} parent=1 // loop_header_branch
      %14 = sbr.rel (%p12) target = $region8
    $region5: #{tpu_custom_call.1} parent=1 // loop_body
      %s16 = ssub.s32 %s11, 1
      %s17 = ssub.s32 %s11, 2
      %s24 = sadd.s32 1, %s19
      %p25 = scmp.ge.s32.totalorder %s24, 1
      %s26 = scalar_select %p25, 0, %s24
      %s27 = sadd.s32 1, %s18
      %s28 = scalar_select %p25, %s27, %s18
      %p29 = scmp.ge.s32.totalorder %s28, 2
      %s30 = scalar_select %p29, 0, %s28
      %s31 = ssub.s32 %s18, %s30
      %p32 = scmp.eq.s32.totalorder %s31, 0
      %s34 = sadd.s32 %s33, 1
      %s35 = scalar_select %p32, %s33, %s34
      %p38 = pneg %p32
      %p39 = scmp.eq.s32.totalorder %s11, 1
      %p40 = por %p38, %p39
      %p41 = scmp.ne.s32.totalorder %s33, %s36
      %p42 = scmp.eq.s32.totalorder %s11, 0
      %p43 = por %p41, %p42
      %p44 = scmp.ne.s32.totalorder %s33, %s36
      %p45 = scmp.eq.s32.totalorder %s16, 1
      %p46 = por %p44, %p45
      %p47 = scmp.ne.s32.totalorder %s36, %s37
      %p48 = scmp.eq.s32.totalorder %s16, 0
      %p49 = por %p47, %p48
      %p50 = scmp.ne.s32.totalorder %s36, %s37
      %p51 = scmp.eq.s32.totalorder %s17, 1
      %p52 = por %p50, %p51
      %p54 = scmp.ne.s32.totalorder %s37, %s53
      %p55 = scmp.eq.s32.totalorder %s17, 0
      %p56 = por %p54, %p55
      %s57 = ssub.s32 %s19, %s26
      %p58 = scmp.eq.s32.totalorder %s57, 0
      %s60 = sadd.s32 %s59, 1
      %s61 = scalar_select %p58, %s59, %s60
      %p64 = pneg %p58
      %p65 = scmp.eq.s32.totalorder %s11, 1
      %p66 = por %p64, %p65
      %p67 = scmp.ne.s32.totalorder %s59, %s62
      %p68 = scmp.eq.s32.totalorder %s11, 0
      %p69 = por %p67, %p68
      %p70 = scmp.ne.s32.totalorder %s59, %s62
      %p71 = scmp.eq.s32.totalorder %s16, 1
      %p72 = por %p70, %p71
      %p73 = scmp.ne.s32.totalorder %s62, %s63
      %p74 = scmp.eq.s32.totalorder %s16, 0
      %p75 = por %p73, %p74
      %p76 = scmp.ne.s32.totalorder %s62, %s63
      %p77 = scmp.eq.s32.totalorder %s17, 1
      %p78 = por %p76, %p77
      %p80 = scmp.ne.s32.totalorder %s63, %s79
      %p81 = scmp.eq.s32.totalorder %s17, 0
      %p82 = por %p80, %p81
      %s83 = ssub.s32 %s18, %s30
      %s84 = ssub.s32 %s19, %s26
      %s85 = sor.u32 %s83, %s84
      %p86 = scmp.eq.s32.totalorder %s85, 0
      %s88 = sadd.s32 %s87, 1
      %s89 = scalar_select %p86, %s87, %s88
      %p92 = pneg %p86
      %p93 = scmp.eq.s32.totalorder %s11, 1
      %p94 = por %p92, %p93
      %p95 = scmp.ne.s32.totalorder %s87, %s90
      %p96 = scmp.eq.s32.totalorder %s11, 0
      %p97 = por %p95, %p96
      %p98 = scmp.ne.s32.totalorder %s87, %s90
      %p99 = scmp.eq.s32.totalorder %s16, 1
      %p100 = por %p98, %p99
      %p101 = scmp.ne.s32.totalorder %s90, %s91
      %p102 = scmp.eq.s32.totalorder %s16, 0
      %p103 = por %p101, %p102
      %p104 = scmp.ne.s32.totalorder %s90, %s91
      %p105 = scmp.eq.s32.totalorder %s17, 1
      %p106 = por %p104, %p105
      %p108 = scmp.ne.s32.totalorder %s91, %s107
      %p109 = scmp.eq.s32.totalorder %s17, 0
      %p110 = por %p108, %p109
      %p111 = scmp.le.s32.totalorder 1, %s11
      %p112 = scmp.lt.s32.totalorder %s11, 3
      %p113 = pnand %p111, %p112
      %p114 = pneg %p113
      // Predicated region
      $region9: #{tpu_custom_call.1} parent=5 // pred_check
        _
      $region10: #{tpu_custom_call.1} parent=5 // pred_check_branch
        %116 = sbr.rel (%p113) target = $region12
      $region11: #{tpu_custom_call.1} parent=5 // pred_region
        %s117 = ssub.s32 %s11, 1
        // Predicated region
        $region13: #{tpu_custom_call.1} parent=11 // pred_check
          %p118 = pneg %p75
        $region14: #{tpu_custom_call.1} parent=11 // pred_check_branch
          %120 = sbr.rel (%p118) target = $region16
        $region15: #{tpu_custom_call.1} parent=11 // pred_region
          %p121 = scmp.lt.s32.totalorder %s21, 0
          %s122 = scalar_select %p121, %s21, 0
          %s123 = smul.addr %s122, 8
          %s124 = scalar_lea.vmem %s1, %s123
        $region16: #{tpu_custom_call.1} parent=11 // pred_fallthru
          _
      $region12: #{tpu_custom_call.1} parent=5 // pred_fallthru
        _
      %p125 = scmp.lt.s32.totalorder %s11, 2
      // Predicated region
      $region17: #{tpu_custom_call.1} parent=5 // pred_check
        %p126 = pneg %p125
      $region18: #{tpu_custom_call.1} parent=5 // pred_check_branch
        %128 = sbr.rel (%p126) target = $region20
      $region19: #{tpu_custom_call.1} parent=5 // pred_region
        // Predicated region
        $region21: #{tpu_custom_call.1} parent=19 // pred_check
          %p129 = pneg %p43
        $region22: #{tpu_custom_call.1} parent=19 // pred_check_branch
          %131 = sbr.rel (%p129) target = $region24
        $region23: #{tpu_custom_call.1} parent=19 // pred_region
          %s132 = smul.u32 32, %s18
          %p133 = scmp.lt.s32.totalorder %s132, 63
          %s134 = scalar_select %p133, %s132, 63
          %s135 = smul.addr %s134, 8
          %s136 = scalar_lea.vmem %s0, %s135
          %s137 = smul.u32 32, %s18
        $region24: #{tpu_custom_call.1} parent=19 // pred_fallthru
          _
      $region20: #{tpu_custom_call.1} parent=5 // pred_fallthru
        _
      %p138 = scmp.le.s32.totalorder 1, %s11
      %p139 = scmp.lt.s32.totalorder %s11, 3
      %p140 = pnand %p138, %p139
      %p141 = pneg %p140
      // Predicated region
      $region25: #{tpu_custom_call.1} parent=5 // pred_check
        _
      $region26: #{tpu_custom_call.1} parent=5 // pred_check_branch
        %143 = sbr.rel (%p140) target = $region28
      $region27: #{tpu_custom_call.1} parent=5 // pred_region
        %s144 = ssub.s32 %s11, 1
        %s145 = smul.u32 32, %s20
        %p146 = scmp.lt.s32.totalorder %s145, 63
        %s147 = scalar_select %p146, %s145, 63
        %s148 = smul.addr %s147, 8
        %s149 = scalar_lea.vmem %s0, %s148
        %p150 = pneg %p49
        %p151 = pneg %p46
        %p152 = scmp.lt.s32.totalorder %s21, 0
        %s153 = scalar_select %p152, %s21, 0
        %s154 = smul.addr %s153, 8
        %s155 = scalar_lea.vmem %s1, %s154
        %p156 = pneg %p75
        %p157 = pneg %p72
        %p158 = pneg %p103
        %p159 = pneg %p100
        %s160 = sand.u32 %s90, 1
        %s161 = scalar_lea.sflag [#allocation3], %s160
        %s162 = sand.u32 %s90, 1
        %s163 = smul.addr %s162, 256
        %s164 = scalar_lea.vmem [#allocation2], %s163
        %s165 = smul.u32 32, %s20
        %p166 = scmp.lt.s32.totalorder %s165, 63
        %s167 = scalar_select %p166, %s165, 63
        %s168 = smul.addr %s167, 8
        %s169 = scalar_lea.vmem %s0, %s168
        %s170 = smul.u32 32, %s20
        %p171 = scmp.lt.s32.totalorder %s21, 0
        %s172 = scalar_select %p171, %s21, 0
        %s173 = smul.addr %s172, 8
        %s174 = scalar_lea.vmem %s1, %s173
        %s175 = smul.u32 32, %s20
        %v176 = vld [vmem:[%s169] sm:$0xff]
        %v177 = vld [vmem:[%s169 + $0x8] sm:$0xff]
        %v178 = vld [vmem:[%s169 + $0x10] sm:$0xff]
        %v179 = vld [vmem:[%s169 + $0x18] sm:$0xff]
        %v180 = vld [vmem:[%s169 + $0x20] sm:$0xff]
        %v181 = vld [vmem:[%s169 + $0x28] sm:$0xff]
        %v182 = vld [vmem:[%s169 + $0x30] sm:$0xff]
        %v183 = vld [vmem:[%s169 + $0x38] sm:$0xff]
        %v184 = vld [vmem:[%s169 + $0x40] sm:$0xff]
        %v185 = vld [vmem:[%s169 + $0x48] sm:$0xff]
        %v186 = vld [vmem:[%s169 + $0x50] sm:$0xff]
        %v187 = vld [vmem:[%s169 + $0x58] sm:$0xff]
        %v188 = vld [vmem:[%s169 + $0x60] sm:$0xff]
        %v189 = vld [vmem:[%s169 + $0x68] sm:$0xff]
        %v190 = vld [vmem:[%s169 + $0x70] sm:$0xff]
        %v191 = vld [vmem:[%s169 + $0x78] sm:$0xff]
        %v192 = vld [vmem:[%s169 + $0x80] sm:$0xff]
        %v193 = vld [vmem:[%s169 + $0x88] sm:$0xff]
        %v194 = vld [vmem:[%s169 + $0x90] sm:$0xff]
        %v195 = vld [vmem:[%s169 + $0x98] sm:$0xff]
        %v196 = vld [vmem:[%s169 + $0xa0] sm:$0xff]
        %v197 = vld [vmem:[%s169 + $0xa8] sm:$0xff]
        %v198 = vld [vmem:[%s169 + $0xb0] sm:$0xff]
        %v199 = vld [vmem:[%s169 + $0xb8] sm:$0xff]
        %v200 = vld [vmem:[%s169 + $0xc0] sm:$0xff]
        %v201 = vld [vmem:[%s169 + $0xc8] sm:$0xff]
        %v202 = vld [vmem:[%s169 + $0xd0] sm:$0xff]
        %v203 = vld [vmem:[%s169 + $0xd8] sm:$0xff]
        %v204 = vld [vmem:[%s169 + $0xe0] sm:$0xff]
        %v205 = vld [vmem:[%s169 + $0xe8] sm:$0xff]
        %v206 = vld [vmem:[%s169 + $0xf0] sm:$0xff]
        %v207 = vld [vmem:[%s169 + $0xf8] sm:$0xff]
        %v208 = vld [vmem:[%s174] sm:$0xff]
        %v209 = vld [vmem:[%s174 + $0x8] sm:$0xff]
        %v210 = vld [vmem:[%s174 + $0x10] sm:$0xff]
        %v211 = vld [vmem:[%s174 + $0x18] sm:$0xff]
        %v212 = vld [vmem:[%s174 + $0x20] sm:$0xff]
        %v213 = vld [vmem:[%s174 + $0x28] sm:$0xff]
        %vm214 = vcmask 392192
        %v216 = vsel %vm214, %v176, 0
        %v219 = vsel %vm214, %v177, 0
        %v222 = vsel %vm214, %v178, 0
        %v225 = vsel %vm214, %v179, 0
        %v228 = vsel %vm214, %v180, 0
        %v231 = vsel %vm214, %v181, 0
        %v234 = vsel %vm214, %v182, 0
        %v237 = vsel %vm214, %v183, 0
        %v240 = vsel %vm214, %v184, 0
        %v243 = vsel %vm214, %v185, 0
        %v246 = vsel %vm214, %v186, 0
        %v249 = vsel %vm214, %v187, 0
        %v252 = vsel %vm214, %v188, 0
        %v255 = vsel %vm214, %v189, 0
        %v258 = vsel %vm214, %v190, 0
        %v261 = vsel %vm214, %v191, 0
        %v264 = vsel %vm214, %v192, 0
        %v267 = vsel %vm214, %v193, 0
        %v270 = vsel %vm214, %v194, 0
        %v273 = vsel %vm214, %v195, 0
        %v276 = vsel %vm214, %v196, 0
        %v279 = vsel %vm214, %v197, 0
        %v282 = vsel %vm214, %v198, 0
        %v285 = vsel %vm214, %v199, 0
        %v288 = vsel %vm214, %v200, 0
        %v291 = vsel %vm214, %v201, 0
        %v294 = vsel %vm214, %v202, 0
        %v297 = vsel %vm214, %v203, 0
        %v300 = vsel %vm214, %v204, 0
        %v303 = vsel %vm214, %v205, 0
        %v306 = vsel %vm214, %v206, 0
        %v309 = vsel %vm214, %v207, 0
        %311 = vmatpush.msra.mxu0 0.0
        %312 = vmatpush.msra.mxu0 0.0
        %313 = vmatpush.msra.mxu0 0.0
        %314 = vmatpush.msra.mxu0 0.0
        %315 = vmatpush.msra.mxu0 0.0
        %316 = vmatpush.msra.mxu0 0.0
        %317 = vmatpush.msra.mxu0 0.0
        %318 = vmatpush.msra.mxu0 0.0
        %319 = vmatpush.msra.mxu0 0.0
        %320 = vmatpush.msra.mxu0 0.0
        %321 = vmatpush.msra.mxu0 %v213
        %322 = vmatpush.msra.mxu0 %v212
        %323 = vmatpush.msra.mxu0 %v211
        %324 = vmatpush.msra.mxu0 %v210
        %325 = vmatpush.msra.mxu0 %v209
        %326 = vmatpush.msra.mxu0 %v208
        %327 = vmatmul.f32.gmra.mxu0 %v216
        %v328 = vpop.f32.mrf.mxu0
        %v329 = vadd.f32 0.0, %v328
        %330 = vmatmul.f32.gmra.mxu0 %v219
        %v331 = vpop.f32.mrf.mxu0
        %v332 = vadd.f32 0.0, %v331
        %333 = vmatmul.f32.gmra.mxu0 %v222
        %v334 = vpop.f32.mrf.mxu0
        %v335 = vadd.f32 0.0, %v334
        %336 = vmatmul.f32.gmra.mxu0 %v225
        %v337 = vpop.f32.mrf.mxu0
        %v338 = vadd.f32 0.0, %v337
        %339 = vmatmul.f32.gmra.mxu0 %v228
        %v340 = vpop.f32.mrf.mxu0
        %v341 = vadd.f32 0.0, %v340
        %342 = vmatmul.f32.gmra.mxu0 %v231
        %v343 = vpop.f32.mrf.mxu0
        %v344 = vadd.f32 0.0, %v343
        %345 = vmatmul.f32.gmra.mxu0 %v234
        %v346 = vpop.f32.mrf.mxu0
        %v347 = vadd.f32 0.0, %v346
        %348 = vmatmul.f32.gmra.mxu0 %v237
        %v349 = vpop.f32.mrf.mxu0
        %v350 = vadd.f32 0.0, %v349
        %351 = vmatmul.f32.gmra.mxu0 %v240
        %v352 = vpop.f32.mrf.mxu0
        %v353 = vadd.f32 0.0, %v352
        %354 = vmatmul.f32.gmra.mxu0 %v243
        %v355 = vpop.f32.mrf.mxu0
        %v356 = vadd.f32 0.0, %v355
        %357 = vmatmul.f32.gmra.mxu0 %v246
        %v358 = vpop.f32.mrf.mxu0
        %v359 = vadd.f32 0.0, %v358
        %360 = vmatmul.f32.gmra.mxu0 %v249
        %v361 = vpop.f32.mrf.mxu0
        %v362 = vadd.f32 0.0, %v361
        %363 = vmatmul.f32.gmra.mxu0 %v252
        %v364 = vpop.f32.mrf.mxu0
        %v365 = vadd.f32 0.0, %v364
        %366 = vmatmul.f32.gmra.mxu0 %v255
        %v367 = vpop.f32.mrf.mxu0
        %v368 = vadd.f32 0.0, %v367
        %369 = vmatmul.f32.gmra.mxu0 %v258
        %v370 = vpop.f32.mrf.mxu0
        %v371 = vadd.f32 0.0, %v370
        %372 = vmatmul.f32.gmra.mxu0 %v261
        %v373 = vpop.f32.mrf.mxu0
        %v374 = vadd.f32 0.0, %v373
        %375 = vmatmul.f32.gmra.mxu0 %v264
        %v376 = vpop.f32.mrf.mxu0
        %v377 = vadd.f32 0.0, %v376
        %378 = vmatmul.f32.gmra.mxu0 %v267
        %v379 = vpop.f32.mrf.mxu0
        %v380 = vadd.f32 0.0, %v379
        %381 = vmatmul.f32.gmra.mxu0 %v270
        %v382 = vpop.f32.mrf.mxu0
        %v383 = vadd.f32 0.0, %v382
        %384 = vmatmul.f32.gmra.mxu0 %v273
        %v385 = vpop.f32.mrf.mxu0
        %v386 = vadd.f32 0.0, %v385
        %387 = vmatmul.f32.gmra.mxu0 %v276
        %v388 = vpop.f32.mrf.mxu0
        %v389 = vadd.f32 0.0, %v388
        %390 = vmatmul.f32.gmra.mxu0 %v279
        %v391 = vpop.f32.mrf.mxu0
        %v392 = vadd.f32 0.0, %v391
        %393 = vmatmul.f32.gmra.mxu0 %v282
        %v394 = vpop.f32.mrf.mxu0
        %v395 = vadd.f32 0.0, %v394
        %396 = vmatmul.f32.gmra.mxu0 %v285
        %v397 = vpop.f32.mrf.mxu0
        %v398 = vadd.f32 0.0, %v397
        %399 = vmatmul.f32.gmra.mxu0 %v288
        %v400 = vpop.f32.mrf.mxu0
        %v401 = vadd.f32 0.0, %v400
        %402 = vmatmul.f32.gmra.mxu0 %v291
        %v403 = vpop.f32.mrf.mxu0
        %v404 = vadd.f32 0.0, %v403
        %405 = vmatmul.f32.gmra.mxu0 %v294
        %v406 = vpop.f32.mrf.mxu0
        %v407 = vadd.f32 0.0, %v406
        %408 = vmatmul.f32.gmra.mxu0 %v297
        %v409 = vpop.f32.mrf.mxu0
        %v410 = vadd.f32 0.0, %v409
        %411 = vmatmul.f32.gmra.mxu0 %v300
        %v412 = vpop.f32.mrf.mxu0
        %v413 = vadd.f32 0.0, %v412
        %414 = vmatmul.f32.gmra.mxu0 %v303
        %v415 = vpop.f32.mrf.mxu0
        %v416 = vadd.f32 0.0, %v415
        %417 = vmatmul.f32.gmra.mxu0 %v306
        %v418 = vpop.f32.mrf.mxu0
        %v419 = vadd.f32 0.0, %v418
        %420 = vmatmul.f32.gmra.mxu0 %v309
        %v421 = vpop.f32.mrf.mxu0
        %v422 = vadd.f32 0.0, %v421
        %423 = vdwg.mxu0
        %v424 = vmax.f32 %v329, 0.0
        %v425 = vmax.f32 %v332, 0.0
        %v426 = vmax.f32 %v335, 0.0
        %v427 = vmax.f32 %v338, 0.0
        %v428 = vmax.f32 %v341, 0.0
        %v429 = vmax.f32 %v344, 0.0
        %v430 = vmax.f32 %v347, 0.0
        %v431 = vmax.f32 %v350, 0.0
        %v432 = vmax.f32 %v353, 0.0
        %v433 = vmax.f32 %v356, 0.0
        %v434 = vmax.f32 %v359, 0.0
        %v435 = vmax.f32 %v362, 0.0
        %v436 = vmax.f32 %v365, 0.0
        %v437 = vmax.f32 %v368, 0.0
        %v438 = vmax.f32 %v371, 0.0
        %v439 = vmax.f32 %v374, 0.0
        %v440 = vmax.f32 %v377, 0.0
        %v441 = vmax.f32 %v380, 0.0
        %v442 = vmax.f32 %v383, 0.0
        %v443 = vmax.f32 %v386, 0.0
        %v444 = vmax.f32 %v389, 0.0
        %v445 = vmax.f32 %v392, 0.0
        %v446 = vmax.f32 %v395, 0.0
        %v447 = vmax.f32 %v398, 0.0
        %v448 = vmax.f32 %v401, 0.0
        %v449 = vmax.f32 %v404, 0.0
        %v450 = vmax.f32 %v407, 0.0
        %v451 = vmax.f32 %v410, 0.0
        %v452 = vmax.f32 %v413, 0.0
        %v453 = vmax.f32 %v416, 0.0
        %v454 = vmax.f32 %v419, 0.0
        %v455 = vmax.f32 %v422, 0.0
        %456 = vst [vmem:[%s164] sm:$0xff] %v424
        %457 = vst [vmem:[%s164 + $0x8] sm:$0xff] %v425
        %458 = vst [vmem:[%s164 + $0x10] sm:$0xff] %v426
        %459 = vst [vmem:[%s164 + $0x18] sm:$0xff] %v427
        %460 = vst [vmem:[%s164 + $0x20] sm:$0xff] %v428
        %461 = vst [vmem:[%s164 + $0x28] sm:$0xff] %v429
        %462 = vst [vmem:[%s164 + $0x30] sm:$0xff] %v430
        %463 = vst [vmem:[%s164 + $0x38] sm:$0xff] %v431
        %464 = vst [vmem:[%s164 + $0x40] sm:$0xff] %v432
        %465 = vst [vmem:[%s164 + $0x48] sm:$0xff] %v433
        %466 = vst [vmem:[%s164 + $0x50] sm:$0xff] %v434
        %467 = vst [vmem:[%s164 + $0x58] sm:$0xff] %v435
        %468 = vst [vmem:[%s164 + $0x60] sm:$0xff] %v436
        %469 = vst [vmem:[%s164 + $0x68] sm:$0xff] %v437
        %470 = vst [vmem:[%s164 + $0x70] sm:$0xff] %v438
        %471 = vst [vmem:[%s164 + $0x78] sm:$0xff] %v439
        %472 = vst [vmem:[%s164 + $0x80] sm:$0xff] %v440
        %473 = vst [vmem:[%s164 + $0x88] sm:$0xff] %v441
        %474 = vst [vmem:[%s164 + $0x90] sm:$0xff] %v442
        %475 = vst [vmem:[%s164 + $0x98] sm:$0xff] %v443
        %476 = vst [vmem:[%s164 + $0xa0] sm:$0xff] %v444
        %477 = vst [vmem:[%s164 + $0xa8] sm:$0xff] %v445
        %478 = vst [vmem:[%s164 + $0xb0] sm:$0xff] %v446
        %479 = vst [vmem:[%s164 + $0xb8] sm:$0xff] %v447
        %480 = vst [vmem:[%s164 + $0xc0] sm:$0xff] %v448
        %481 = vst [vmem:[%s164 + $0xc8] sm:$0xff] %v449
        %482 = vst [vmem:[%s164 + $0xd0] sm:$0xff] %v450
        %483 = vst [vmem:[%s164 + $0xd8] sm:$0xff] %v451
        %484 = vst [vmem:[%s164 + $0xe0] sm:$0xff] %v452
        %485 = vst [vmem:[%s164 + $0xe8] sm:$0xff] %v453
        %486 = vst [vmem:[%s164 + $0xf0] sm:$0xff] %v454
        %487 = vst [vmem:[%s164 + $0xf8] sm:$0xff] %v455
        %s488 = sand.u32 %s90, 1
        %s489 = scalar_lea.sflag [#allocation3], %s488
        %s490 = sand.u32 %s90, 1
        %s491 = smul.addr %s490, 256
        %s492 = scalar_lea.vmem [#allocation2], %s491
        // Predicated region
        $region29: #{tpu_custom_call.1} parent=27 // pred_check
          %p493 = pneg %p100
        $region30: #{tpu_custom_call.1} parent=27 // pred_check_branch
          %495 = sbr.rel (%p493) target = $region32
        $region31: #{tpu_custom_call.1} parent=27 // pred_region
          %s496 = smul.u32 32, %s20
          %498 = vsyncadd %s489, 0
          %s499 = sadd.s32 %s21, %s496
          %s500 = smul.addr %s499, 8
          %s501 = scalar_lea.hbm %s2, %s500
          %s502 = sshll.u32 %s492, 4
          %s503 = int_to_ptr.vmem [resolvable:$true] %s502
          %s504 = sshll.u32 %s501, 4
          %s505 = int_to_ptr.hbm [resolvable:$true] %s504
          %510 = dma.vmem_to_hbm [thread:$0]  %s503, 4096, %s505, %s489, 128, 128, 8
        $region32: #{tpu_custom_call.1} parent=27 // pred_fallthru
          _
      $region28: #{tpu_custom_call.1} parent=5 // pred_fallthru
        _
      %p511 = scmp.le.s32.totalorder 2, %s11
      // Predicated region
      $region33: #{tpu_custom_call.1} parent=5 // pred_check
        %p512 = pneg %p511
      $region34: #{tpu_custom_call.1} parent=5 // pred_check_branch
        %514 = sbr.rel (%p512) target = $region36
      $region35: #{tpu_custom_call.1} parent=5 // pred_region
        %s515 = ssub.s32 %s11, 2
        // Predicated region
        $region37: #{tpu_custom_call.1} parent=35 // pred_check
          %p516 = pneg %p106
        $region38: #{tpu_custom_call.1} parent=35 // pred_check_branch
          %518 = sbr.rel (%p516) target = $region40
        $region39: #{tpu_custom_call.1} parent=35 // pred_region
          %s519 = sand.u32 %s91, 1
          %s520 = scalar_lea.sflag [#allocation3], %s519
          %s521 = sand.u32 %s91, 1
          %s522 = smul.addr %s521, 256
          %s523 = scalar_lea.vmem [#allocation2], %s522
          %525 = dma.done %s520, 4096
        $region40: #{tpu_custom_call.1} parent=35 // pred_fallthru
          _
      $region36: #{tpu_custom_call.1} parent=5 // pred_fallthru
        _
    $region6: #{tpu_custom_call.1} parent=1 // loop_footer
      %s15 = sadd.s32 1, %s11
    $region7: #{tpu_custom_call.1} parent=1 // loop_footer_branch
      %10 = sbr.rel target = $region3
    $region8: #{tpu_custom_call.1} parent=1 // loop_exit
      _
    %526 = vsyncpa [#allocation3], 1
    %s527 = scalar_lea.sflag [#allocation3], 1
    %528 = vsyncpa %s527, 1

</llo_original>
